<compile_context>
chip_gen: v6e
topology: v6e:2x2x1
jax: 0.10.0
libtpu: 0.0.40
codegen_flags: <defaults>
</compile_context>

<pallas_src>
import functools
from dataclasses import dataclass, field

import jax
import jax.numpy as jnp
from jax import lax
from jax.experimental import pallas as pl
from jax.experimental.pallas import tpu as pltpu


def _round_up(x, m):
    return (x + m - 1) // m * m


# ------------------------------------------------------------------ config --
@dataclass
class ConfigBase:
    input_dim: int = 4
    output_dim: int = 4
    activation: str = "ReLU"                      # 'ReLU' or 'GELU'
    structure: list = field(default_factory=lambda: [4, 8, 8, 4])


def _activation_fn(name):
    if name == "ReLU":
        return lambda x: jnp.maximum(x, 0.0)
    elif name == "GELU":
        # exact (erf) GELU, matching nn.GELU() default
        return lambda x: 0.5 * x * (1.0 + lax.erf(x * 0.7071067811865476))
    raise ValueError(f"unknown activation {name}")


# ---------------------------------------------------------- weight packing --
def _pack_conv3x3(w, b):
    """(3,3,cin,cout) weight + (cout,) bias -> (cout_pad, 9*cin_pad + 8) f32.

    Row   = output channel (padded to a multiple of 8; pad rows are zero).
    Col k = t*cin_pad + c  for tap t = dy*3 + dx and input channel c.
    The last 8 columns carry the bias in column 0; the kernel's patches
    scratch holds a matching ones/zeros block in its last 8 rows.
    """
    cin, cout = w.shape[2], w.shape[3]
    cpi, cpo = _round_up(cin, 8), _round_up(cout, 8)
    wp = jnp.zeros((3, 3, cpi, cpo), jnp.float32)
    wp = wp.at[:, :, :cin, :cout].set(w.astype(jnp.float32))
    w2d = wp.reshape(9 * cpi, cpo).T                        # (cpo, 9*cpi)
    bias_cols = jnp.zeros((cpo, 8), jnp.float32)
    bias_cols = bias_cols.at[:cout, 0].set(b.astype(jnp.float32))
    return jnp.concatenate([w2d, bias_cols], axis=1)        # (cpo, 9*cpi + 8)


# ------------------------------------------------------- host-side constants --
def _tap_mask_host(H, W, dy, dx):
    """(H*W,) f32 mask: 1 where input tap (dy,dx) is inside the image."""
    y = jnp.arange(H)[:, None]
    x = jnp.arange(W)[None, :]
    m = jnp.ones((H, W), jnp.float32)
    if dy == 0:
        m = m * (y >= 1)
    elif dy == 2:
        m = m * (y <= H - 2)
    if dx == 0:
        m = m * (x >= 1)
    elif dx == 2:
        m = m * (x <= W - 2)
    return m.reshape(-1)


def _build_consts(H, W, b_blk):
    """(24, b_blk*H*W) f32 constants input.

    rows 0..7  : bias block (row 0 ones, rows 1..7 zeros)
    rows 8..16 : the 9 tap masks (tap t = dy*3+dx), tiled per image
    rows 17..23: zero padding (sublane-tile alignment)
    """
    HW = H * W
    masks = jnp.stack([_tap_mask_host(H, W, t // 3, t % 3) for t in range(9)])
    masks = jnp.tile(masks, (1, b_blk))                     # (9, L)
    L = b_blk * HW
    consts = jnp.zeros((24, L), jnp.float32)
    consts = consts.at[0, :].set(1.0)
    consts = consts.at[8:17, :].set(masks)
    return consts


# ------------------------------------------------------------------ kernel --
def _fused_cnn_kernel(*refs, W, n_layers, cpis, act_name):
    """All conv layers for one batch block, fused.

    refs = (x_ref, consts_ref, w_ref_0..w_ref_{L-1}, o_ref, patches_ref)
      x_ref       : (1, c_pad0, L)            input block (channels on sublanes)
      consts_ref  : (24, L)                   bias block + tap masks
      w_ref_l     : (cout_pad, 9*cin_pad + 8) packed weights+bias of layer l
      o_ref       : (1, c_pad_last, L)        output block
      patches_ref : (K_max, L) f32            persistent im2col scratch
    """
    x_ref = refs[0]
    c_ref = refs[1]
    w_refs = refs[2:2 + n_layers]
    o_ref = refs[2 + n_layers]
    p_ref = refs[3 + n_layers]

    L = x_ref.shape[-1]
    f32 = jnp.float32
    act = _activation_fn(act_name)

    same_cpi = all(c == cpis[0] for c in cpis)
    cpad = cpis[0]

    # Bias rows (ones + 7 zeros) of the patches scratch: written once per
    # invocation when every layer uses the same offset.
    if same_cpi:
        p_ref[9 * cpad:9 * cpad + 8, :] = c_ref[0:8, :]

    # Hoisted tap masks, broadcast once to the common padded channel count.
    masks = [None] * 9
    if same_cpi:
        for t in range(9):
            if t != 4:                                      # center tap: no mask
                masks[t] = jnp.broadcast_to(c_ref[8 + t:9 + t, :], (cpad, L))

    h = x_ref[0].astype(f32)                                # (c_pad0, L)

    for l in range(n_layers):
        cpi = cpis[l]
        if not same_cpi:
            p_ref[9 * cpi:9 * cpi + 8, :] = c_ref[0:8, :]
        # 9 shifted taps -> masked -> stored into the persistent patches scratch
        for t in range(9):
            dy, dx = t // 3, t % 3
            off = (dy - 1) * W + (dx - 1)                   # flat input offset
            v = h if off == 0 else pltpu.roll(h, shift=(-off) % L, axis=1)
            if t != 4:
                m = masks[t] if same_cpi else c_ref[8 + t:9 + t, :]
                v = v * m                                   # zero-pad borders
            p_ref[t * cpi:(t + 1) * cpi, :] = v
        # ONE im2col MXU matmul per layer (bias folded into the weights).
        out = jnp.dot(w_refs[l][...], p_ref[0:9 * cpi + 8, :],
                      preferred_element_type=f32)
        h = act(out) if l < n_layers - 1 else out           # no act on last

    o_ref[0] = h.astype(o_ref.dtype)


# ----------------------------------------------------------------- wrapper --
def _choose_batch_block(N, HW, *, target_lanes=4096, min_blocks=2):
    """Images per grid step: fatten the lane dim but keep >= min_blocks grid
    blocks (v7x has 2 TensorCores) whenever N allows."""
    if N <= 1:
        return 1
    b = max(1, min(N, target_lanes // max(HW, 1)))
    b = min(b, max(1, N // min_blocks))
    return max(1, b)


def fused_cnn_forward(x_nchw, packed_ws, *, structure, act_name):
    N, C0, H, W = x_nchw.shape
    HW = H * W
    n_layers = len(packed_ws)
    c_out = structure[-1]
    c_pad0 = _round_up(C0, 8)
    c_pad_out = _round_up(c_out, 8)
    cpis = tuple(_round_up(structure[l], 8) for l in range(n_layers))
    k_max = max(9 * c + 8 for c in cpis)

    # Packing-consistency asserts (layer l's padded cin == layer l-1's padded cout).
    for l in range(n_layers):
        assert packed_ws[l].shape == (_round_up(structure[l + 1], 8),
                                      9 * cpis[l] + 8)
        if l > 0:
            assert packed_ws[l - 1].shape[0] == cpis[l]

    # ---- batch blocking: images stacked along the lane axis -----------------
    b_blk = _choose_batch_block(N, HW)
    num_blocks = (N + b_blk - 1) // b_blk
    n_pad = num_blocks * b_blk
    L = b_blk * HW

    x = x_nchw.reshape(N, C0, HW)
    if (n_pad - N) or (c_pad0 - C0):
        x = jnp.pad(x, ((0, n_pad - N), (0, c_pad0 - C0), (0, 0)))
    # (n_pad, c_pad0, HW) -> (num_blocks, c_pad0, b_blk*HW); images contiguous
    # on the lane axis (masks are tiled per image to match).
    x = x.reshape(num_blocks, b_blk, c_pad0, HW).transpose(0, 2, 1, 3)
    x = x.reshape(num_blocks, c_pad0, L)

    consts = _build_consts(H, W, b_blk)

    kernel = functools.partial(_fused_cnn_kernel, W=W, n_layers=n_layers,
                               cpis=cpis, act_name=act_name)

    # Grid-invariant index maps for consts/weights -> DMA'd once, not per step.
    in_specs = [pl.BlockSpec((1, c_pad0, L), lambda g: (g, 0, 0)),
                pl.BlockSpec(consts.shape, lambda g: (0, 0))]
    in_specs += [pl.BlockSpec(wp.shape, lambda g: (0, 0)) for wp in packed_ws]

    out = pl.pallas_call(
        kernel,
        out_shape=jax.ShapeDtypeStruct((num_blocks, c_pad_out, L), x_nchw.dtype),
        grid_spec=pltpu.PrefetchScalarGridSpec(
            num_scalar_prefetch=0,
            grid=(num_blocks,),
            in_specs=in_specs,
            out_specs=pl.BlockSpec((1, c_pad_out, L), lambda g: (g, 0, 0)),
            scratch_shapes=[pltpu.VMEM((k_max, L), jnp.float32)],
        ),
        compiler_params=pltpu.CompilerParams(
            dimension_semantics=("parallel",)),   # shards blocks on v7x's 2 TCs
    )(x, consts, *packed_ws)

    out = out.reshape(num_blocks, c_pad_out, b_blk, HW).transpose(0, 2, 1, 3)
    out = out.reshape(n_pad, c_pad_out, HW)[:N, :c_out]
    return out.reshape(N, c_out, H, W)


# ------------------------------------------------------------------ module --
class BaseCNNPallas:
    def __init__(self, args: ConfigBase, key):
        self.args = args
        self.act_name = args.activation
        self.structure = list(args.structure)
        self.n_layers = len(self.structure) - 1
        self.params = []      # raw (w, b) params (for the reference check)
        self.packed = []      # lane-dense packed weights consumed by the kernel
        for i in range(self.n_layers):
            cin, cout = self.structure[i], self.structure[i + 1]
            key, kw, kb = jax.random.split(key, 3)
            # PyTorch-style uniform init, bound 1/sqrt(fan_in)
            bound = 1.0 / (cin * 9) ** 0.5
            w = jax.random.uniform(kw, (3, 3, cin, cout), jnp.float32,
                                   -bound, bound)
            b = jax.random.uniform(kb, (cout,), jnp.float32, -bound, bound)
            self.params.append((w, b))
            self.packed.append(_pack_conv3x3(w, b))

    def __call__(self, x_nchw):
        return fused_cnn_forward(x_nchw, self.packed,
                                 structure=self.structure,
                                 act_name=self.act_name)


# --------------------------------------------------------------- reference --
def _reference_forward(model, x_nchw):
    x = x_nchw
    act = _activation_fn(model.act_name)
    for i, (w, b) in enumerate(model.params):
        w_oihw = jnp.transpose(w, (3, 2, 0, 1))
        x = lax.conv_general_dilated(
            x, w_oihw, window_strides=(1, 1), padding=((1, 1), (1, 1)),
            dimension_numbers=("NCHW", "OIHW", "NCHW"),
            precision=lax.Precision.HIGHEST)
        x = x + b.reshape(1, -1, 1, 1)
        if i < model.n_layers - 1:
            x = act(x)
    return x


# ------------------------------------------------------------------- main ---
if __name__ == "__main__":
    args = ConfigBase(input_dim=4, output_dim=4, activation="ReLU",
                      structure=[4, 8, 8, 4])

    key = jax.random.PRNGKey(0)
    key, kx = jax.random.split(key)
    x = jax.random.normal(kx, (2, 4, 16, 16), jnp.float32)   # NCHW like PyTorch

    model = BaseCNNPallas(args, key)

    fwd = jax.jit(model.__call__)
    out = jax.block_until_ready(fwd(x))

    ref = _reference_forward(model, x)
    assert out.shape == ref.shape == (2, 4, 16, 16)
    assert jnp.allclose(out, ref, atol=1e-3, rtol=1e-3), "mismatch vs reference"

    print("KERNEL_OK")
</pallas_src>

<mosaic_0001>
module attributes {stable_mosaic.version = 11 : i64} {
  func.func @_fused_cnn_kernel(%arg0: i32, %arg1: memref<1x8x256xf32, #tpu.memory_space<vmem>>, %arg2: memref<24x256xf32, #tpu.memory_space<vmem>>, %arg3: memref<8x80xf32, #tpu.memory_space<vmem>>, %arg4: memref<8x80xf32, #tpu.memory_space<vmem>>, %arg5: memref<8x80xf32, #tpu.memory_space<vmem>>, %arg6: memref<1x8x256xf32, #tpu.memory_space<vmem>>, %arg7: memref<80x256xf32, #tpu.memory_space<vmem>>) attributes {dimension_semantics = [#tpu.dimension_semantics<parallel>], iteration_bounds = array<i64: 2>, scalar_prefetch = 0 : i64, scratch_operands = 1 : i64, tpu.core_type = #tpu.core_type<tc>, window_params = [{transform_indices = @transform_0, window_bounds = array<i64: 1, 8, 256>}, {pipeline_mode = #tpu.pipeline_mode<synchronous>, transform_indices = @transform_1, window_bounds = array<i64: 24, 256>}, {pipeline_mode = #tpu.pipeline_mode<synchronous>, transform_indices = @transform_2, window_bounds = array<i64: 8, 80>}, {pipeline_mode = #tpu.pipeline_mode<synchronous>, transform_indices = @transform_3, window_bounds = array<i64: 8, 80>}, {pipeline_mode = #tpu.pipeline_mode<synchronous>, transform_indices = @transform_4, window_bounds = array<i64: 8, 80>}, {transform_indices = @transform_5, window_bounds = array<i64: 1, 8, 256>}]} {
    %c0 = arith.constant 0 : index
    %c0_0 = arith.constant 0 : index
    %0 = vector.load %arg2[%c0, %c0_0] : memref<24x256xf32, #tpu.memory_space<vmem>>, vector<8x256xf32>
    %c72 = arith.constant 72 : index
    %c0_1 = arith.constant 0 : index
    %1 = vector.load %arg7[%c72, %c0_1] : memref<80x256xf32, #tpu.memory_space<vmem>>, vector<8x256xf32>
    tpu.vector_store %arg7[%c72, %c0_1], %0 {strides = array<i32>} : memref<80x256xf32, #tpu.memory_space<vmem>>, vector<8x256xf32>,
    %c8 = arith.constant 8 : index
    %c0_2 = arith.constant 0 : index
    %2 = vector.load %arg2[%c8, %c0_2] : memref<24x256xf32, #tpu.memory_space<vmem>>, vector<1x256xf32>
    %3 = vector.shape_cast %2 : vector<1x256xf32> to vector<1x256xf32>
    %4 = vector.broadcast %3 : vector<1x256xf32> to vector<8x256xf32>
    %c9 = arith.constant 9 : index
    %c0_3 = arith.constant 0 : index
    %5 = vector.load %arg2[%c9, %c0_3] : memref<24x256xf32, #tpu.memory_space<vmem>>, vector<1x256xf32>
    %6 = vector.shape_cast %5 : vector<1x256xf32> to vector<1x256xf32>
    %7 = vector.broadcast %6 : vector<1x256xf32> to vector<8x256xf32>
    %c10 = arith.constant 10 : index
    %c0_4 = arith.constant 0 : index
    %8 = vector.load %arg2[%c10, %c0_4] : memref<24x256xf32, #tpu.memory_space<vmem>>, vector<1x256xf32>
    %9 = vector.shape_cast %8 : vector<1x256xf32> to vector<1x256xf32>
    %10 = vector.broadcast %9 : vector<1x256xf32> to vector<8x256xf32>
    %c11 = arith.constant 11 : index
    %c0_5 = arith.constant 0 : index
    %11 = vector.load %arg2[%c11, %c0_5] : memref<24x256xf32, #tpu.memory_space<vmem>>, vector<1x256xf32>
    %12 = vector.shape_cast %11 : vector<1x256xf32> to vector<1x256xf32>
    %13 = vector.broadcast %12 : vector<1x256xf32> to vector<8x256xf32>
    %c13 = arith.constant 13 : index
    %c0_6 = arith.constant 0 : index
    %14 = vector.load %arg2[%c13, %c0_6] : memref<24x256xf32, #tpu.memory_space<vmem>>, vector<1x256xf32>
    %15 = vector.shape_cast %14 : vector<1x256xf32> to vector<1x256xf32>
    %16 = vector.broadcast %15 : vector<1x256xf32> to vector<8x256xf32>
    %c14 = arith.constant 14 : index
    %c0_7 = arith.constant 0 : index
    %17 = vector.load %arg2[%c14, %c0_7] : memref<24x256xf32, #tpu.memory_space<vmem>>, vector<1x256xf32>
    %18 = vector.shape_cast %17 : vector<1x256xf32> to vector<1x256xf32>
    %19 = vector.broadcast %18 : vector<1x256xf32> to vector<8x256xf32>
    %c15 = arith.constant 15 : index
    %c0_8 = arith.constant 0 : index
    %20 = vector.load %arg2[%c15, %c0_8] : memref<24x256xf32, #tpu.memory_space<vmem>>, vector<1x256xf32>
    %21 = vector.shape_cast %20 : vector<1x256xf32> to vector<1x256xf32>
    %22 = vector.broadcast %21 : vector<1x256xf32> to vector<8x256xf32>
    %c16 = arith.constant 16 : index
    %c0_9 = arith.constant 0 : index
    %23 = vector.load %arg2[%c16, %c0_9] : memref<24x256xf32, #tpu.memory_space<vmem>>, vector<1x256xf32>
    %24 = vector.shape_cast %23 : vector<1x256xf32> to vector<1x256xf32>
    %25 = vector.broadcast %24 : vector<1x256xf32> to vector<8x256xf32>
    %c0_10 = arith.constant 0 : index
    %c0_11 = arith.constant 0 : index
    %c0_12 = arith.constant 0 : index
    %26 = vector.load %arg1[%c0_10, %c0_11, %c0_12] : memref<1x8x256xf32, #tpu.memory_space<vmem>>, vector<1x8x256xf32>
    %27 = vector.shape_cast %26 : vector<1x8x256xf32> to vector<8x256xf32>
    %c17_i32 = arith.constant 17 : i32
    %28 = tpu.dynamic_rotate %27 by %c17_i32 dim 1 : vector<8x256xf32>, i32 -> vector<8x256xf32>
    %29 = arith.mulf %28, %4 : vector<8x256xf32>
    %c0_13 = arith.constant 0 : index
    %c0_14 = arith.constant 0 : index
    %30 = vector.load %arg7[%c0_13, %c0_14] : memref<80x256xf32, #tpu.memory_space<vmem>>, vector<8x256xf32>
    tpu.vector_store %arg7[%c0_13, %c0_14], %29 {strides = array<i32>} : memref<80x256xf32, #tpu.memory_space<vmem>>, vector<8x256xf32>,
    %c16_i32 = arith.constant 16 : i32
    %31 = tpu.dynamic_rotate %27 by %c16_i32 dim 1 : vector<8x256xf32>, i32 -> vector<8x256xf32>
    %32 = arith.mulf %31, %7 : vector<8x256xf32>
    %c8_15 = arith.constant 8 : index
    %c0_16 = arith.constant 0 : index
    %33 = vector.load %arg7[%c8_15, %c0_16] : memref<80x256xf32, #tpu.memory_space<vmem>>, vector<8x256xf32>
    tpu.vector_store %arg7[%c8_15, %c0_16], %32 {strides = array<i32>} : memref<80x256xf32, #tpu.memory_space<vmem>>, vector<8x256xf32>,
    %c15_i32 = arith.constant 15 : i32
    %34 = tpu.dynamic_rotate %27 by %c15_i32 dim 1 : vector<8x256xf32>, i32 -> vector<8x256xf32>
    %35 = arith.mulf %34, %10 : vector<8x256xf32>
    %c16_17 = arith.constant 16 : index
    %c0_18 = arith.constant 0 : index
    %36 = vector.load %arg7[%c16_17, %c0_18] : memref<80x256xf32, #tpu.memory_space<vmem>>, vector<8x256xf32>
    tpu.vector_store %arg7[%c16_17, %c0_18], %35 {strides = array<i32>} : memref<80x256xf32, #tpu.memory_space<vmem>>, vector<8x256xf32>,
    %c1_i32 = arith.constant 1 : i32
    %37 = tpu.dynamic_rotate %27 by %c1_i32 dim 1 : vector<8x256xf32>, i32 -> vector<8x256xf32>
    %38 = arith.mulf %37, %13 : vector<8x256xf32>
    %c24 = arith.constant 24 : index
    %c0_19 = arith.constant 0 : index
    %39 = vector.load %arg7[%c24, %c0_19] : memref<80x256xf32, #tpu.memory_space<vmem>>, vector<8x256xf32>
    tpu.vector_store %arg7[%c24, %c0_19], %38 {strides = array<i32>} : memref<80x256xf32, #tpu.memory_space<vmem>>, vector<8x256xf32>,
    %c32 = arith.constant 32 : index
    %c0_20 = arith.constant 0 : index
    %40 = vector.load %arg7[%c32, %c0_20] : memref<80x256xf32, #tpu.memory_space<vmem>>, vector<8x256xf32>
    tpu.vector_store %arg7[%c32, %c0_20], %27 {strides = array<i32>} : memref<80x256xf32, #tpu.memory_space<vmem>>, vector<8x256xf32>,
    %c255_i32 = arith.constant 255 : i32
    %41 = tpu.dynamic_rotate %27 by %c255_i32 dim 1 : vector<8x256xf32>, i32 -> vector<8x256xf32>
    %42 = arith.mulf %41, %16 : vector<8x256xf32>
    %c40 = arith.constant 40 : index
    %c0_21 = arith.constant 0 : index
    %43 = vector.load %arg7[%c40, %c0_21] : memref<80x256xf32, #tpu.memory_space<vmem>>, vector<8x256xf32>
    tpu.vector_store %arg7[%c40, %c0_21], %42 {strides = array<i32>} : memref<80x256xf32, #tpu.memory_space<vmem>>, vector<8x256xf32>,
    %c241_i32 = arith.constant 241 : i32
    %44 = tpu.dynamic_rotate %27 by %c241_i32 dim 1 : vector<8x256xf32>, i32 -> vector<8x256xf32>
    %45 = arith.mulf %44, %19 : vector<8x256xf32>
    %c48 = arith.constant 48 : index
    %c0_22 = arith.constant 0 : index
    %46 = vector.load %arg7[%c48, %c0_22] : memref<80x256xf32, #tpu.memory_space<vmem>>, vector<8x256xf32>
    tpu.vector_store %arg7[%c48, %c0_22], %45 {strides = array<i32>} : memref<80x256xf32, #tpu.memory_space<vmem>>, vector<8x256xf32>,
    %c240_i32 = arith.constant 240 : i32
    %47 = tpu.dynamic_rotate %27 by %c240_i32 dim 1 : vector<8x256xf32>, i32 -> vector<8x256xf32>
    %48 = arith.mulf %47, %22 : vector<8x256xf32>
    %c56 = arith.constant 56 : index
    %c0_23 = arith.constant 0 : index
    %49 = vector.load %arg7[%c56, %c0_23] : memref<80x256xf32, #tpu.memory_space<vmem>>, vector<8x256xf32>
    tpu.vector_store %arg7[%c56, %c0_23], %48 {strides = array<i32>} : memref<80x256xf32, #tpu.memory_space<vmem>>, vector<8x256xf32>,
    %c239_i32 = arith.constant 239 : i32
    %50 = tpu.dynamic_rotate %27 by %c239_i32 dim 1 : vector<8x256xf32>, i32 -> vector<8x256xf32>
    %51 = arith.mulf %50, %25 : vector<8x256xf32>
    %c64 = arith.constant 64 : index
    %c0_24 = arith.constant 0 : index
    %52 = vector.load %arg7[%c64, %c0_24] : memref<80x256xf32, #tpu.memory_space<vmem>>, vector<8x256xf32>
    tpu.vector_store %arg7[%c64, %c0_24], %51 {strides = array<i32>} : memref<80x256xf32, #tpu.memory_space<vmem>>, vector<8x256xf32>,
    %c0_25 = arith.constant 0 : index
    %c0_26 = arith.constant 0 : index
    %53 = vector.load %arg3[%c0_25, %c0_26] : memref<8x80xf32, #tpu.memory_space<vmem>>, vector<8x80xf32>
    %c0_27 = arith.constant 0 : index
    %c0_28 = arith.constant 0 : index
    %54 = vector.load %arg7[%c0_27, %c0_28] : memref<80x256xf32, #tpu.memory_space<vmem>>, vector<80x256xf32>
    %cst = arith.constant dense<0.000000e+00> : vector<8x256xf32>
    %55 = tpu.matmul %53, %54, %cst {dimension_numbers = #tpu.dot_dimension_numbers<[1], [0], [0], [1], [0, 0, 1, 1], [], []>} : vector<8x80xf32>, vector<80x256xf32>, vector<8x256xf32> -> vector<8x256xf32>
    %cst_29 = arith.constant 0.000000e+00 : f32
    %56 = vector.broadcast %cst_29 : f32 to vector<8x256xf32>
    %57 = arith.maximumf %55, %56 : vector<8x256xf32>
    %c17_i32_30 = arith.constant 17 : i32
    %58 = tpu.dynamic_rotate %57 by %c17_i32_30 dim 1 : vector<8x256xf32>, i32 -> vector<8x256xf32>
    %59 = arith.mulf %58, %4 : vector<8x256xf32>
    %c0_31 = arith.constant 0 : index
    %c0_32 = arith.constant 0 : index
    %60 = vector.load %arg7[%c0_31, %c0_32] : memref<80x256xf32, #tpu.memory_space<vmem>>, vector<8x256xf32>
    tpu.vector_store %arg7[%c0_31, %c0_32], %59 {strides = array<i32>} : memref<80x256xf32, #tpu.memory_space<vmem>>, vector<8x256xf32>,
    %c16_i32_33 = arith.constant 16 : i32
    %61 = tpu.dynamic_rotate %57 by %c16_i32_33 dim 1 : vector<8x256xf32>, i32 -> vector<8x256xf32>
    %62 = arith.mulf %61, %7 : vector<8x256xf32>
    %c8_34 = arith.constant 8 : index
    %c0_35 = arith.constant 0 : index
    %63 = vector.load %arg7[%c8_34, %c0_35] : memref<80x256xf32, #tpu.memory_space<vmem>>, vector<8x256xf32>
    tpu.vector_store %arg7[%c8_34, %c0_35], %62 {strides = array<i32>} : memref<80x256xf32, #tpu.memory_space<vmem>>, vector<8x256xf32>,
    %c15_i32_36 = arith.constant 15 : i32
    %64 = tpu.dynamic_rotate %57 by %c15_i32_36 dim 1 : vector<8x256xf32>, i32 -> vector<8x256xf32>
    %65 = arith.mulf %64, %10 : vector<8x256xf32>
    %c16_37 = arith.constant 16 : index
    %c0_38 = arith.constant 0 : index
    %66 = vector.load %arg7[%c16_37, %c0_38] : memref<80x256xf32, #tpu.memory_space<vmem>>, vector<8x256xf32>
    tpu.vector_store %arg7[%c16_37, %c0_38], %65 {strides = array<i32>} : memref<80x256xf32, #tpu.memory_space<vmem>>, vector<8x256xf32>,
    %c1_i32_39 = arith.constant 1 : i32
    %67 = tpu.dynamic_rotate %57 by %c1_i32_39 dim 1 : vector<8x256xf32>, i32 -> vector<8x256xf32>
    %68 = arith.mulf %67, %13 : vector<8x256xf32>
    %c24_40 = arith.constant 24 : index
    %c0_41 = arith.constant 0 : index
    %69 = vector.load %arg7[%c24_40, %c0_41] : memref<80x256xf32, #tpu.memory_space<vmem>>, vector<8x256xf32>
    tpu.vector_store %arg7[%c24_40, %c0_41], %68 {strides = array<i32>} : memref<80x256xf32, #tpu.memory_space<vmem>>, vector<8x256xf32>,
    %c32_42 = arith.constant 32 : index
    %c0_43 = arith.constant 0 : index
    %70 = vector.load %arg7[%c32_42, %c0_43] : memref<80x256xf32, #tpu.memory_space<vmem>>, vector<8x256xf32>
    tpu.vector_store %arg7[%c32_42, %c0_43], %57 {strides = array<i32>} : memref<80x256xf32, #tpu.memory_space<vmem>>, vector<8x256xf32>,
    %c255_i32_44 = arith.constant 255 : i32
    %71 = tpu.dynamic_rotate %57 by %c255_i32_44 dim 1 : vector<8x256xf32>, i32 -> vector<8x256xf32>
    %72 = arith.mulf %71, %16 : vector<8x256xf32>
    %c40_45 = arith.constant 40 : index
    %c0_46 = arith.constant 0 : index
    %73 = vector.load %arg7[%c40_45, %c0_46] : memref<80x256xf32, #tpu.memory_space<vmem>>, vector<8x256xf32>
    tpu.vector_store %arg7[%c40_45, %c0_46], %72 {strides = array<i32>} : memref<80x256xf32, #tpu.memory_space<vmem>>, vector<8x256xf32>,
    %c241_i32_47 = arith.constant 241 : i32
    %74 = tpu.dynamic_rotate %57 by %c241_i32_47 dim 1 : vector<8x256xf32>, i32 -> vector<8x256xf32>
    %75 = arith.mulf %74, %19 : vector<8x256xf32>
    %c48_48 = arith.constant 48 : index
    %c0_49 = arith.constant 0 : index
    %76 = vector.load %arg7[%c48_48, %c0_49] : memref<80x256xf32, #tpu.memory_space<vmem>>, vector<8x256xf32>
    tpu.vector_store %arg7[%c48_48, %c0_49], %75 {strides = array<i32>} : memref<80x256xf32, #tpu.memory_space<vmem>>, vector<8x256xf32>,
    %c240_i32_50 = arith.constant 240 : i32
    %77 = tpu.dynamic_rotate %57 by %c240_i32_50 dim 1 : vector<8x256xf32>, i32 -> vector<8x256xf32>
    %78 = arith.mulf %77, %22 : vector<8x256xf32>
    %c56_51 = arith.constant 56 : index
    %c0_52 = arith.constant 0 : index
    %79 = vector.load %arg7[%c56_51, %c0_52] : memref<80x256xf32, #tpu.memory_space<vmem>>, vector<8x256xf32>
    tpu.vector_store %arg7[%c56_51, %c0_52], %78 {strides = array<i32>} : memref<80x256xf32, #tpu.memory_space<vmem>>, vector<8x256xf32>,
    %c239_i32_53 = arith.constant 239 : i32
    %80 = tpu.dynamic_rotate %57 by %c239_i32_53 dim 1 : vector<8x256xf32>, i32 -> vector<8x256xf32>
    %81 = arith.mulf %80, %25 : vector<8x256xf32>
    %c64_54 = arith.constant 64 : index
    %c0_55 = arith.constant 0 : index
    %82 = vector.load %arg7[%c64_54, %c0_55] : memref<80x256xf32, #tpu.memory_space<vmem>>, vector<8x256xf32>
    tpu.vector_store %arg7[%c64_54, %c0_55], %81 {strides = array<i32>} : memref<80x256xf32, #tpu.memory_space<vmem>>, vector<8x256xf32>,
    %c0_56 = arith.constant 0 : index
    %c0_57 = arith.constant 0 : index
    %83 = vector.load %arg4[%c0_56, %c0_57] : memref<8x80xf32, #tpu.memory_space<vmem>>, vector<8x80xf32>
    %c0_58 = arith.constant 0 : index
    %c0_59 = arith.constant 0 : index
    %84 = vector.load %arg7[%c0_58, %c0_59] : memref<80x256xf32, #tpu.memory_space<vmem>>, vector<80x256xf32>
    %cst_60 = arith.constant dense<0.000000e+00> : vector<8x256xf32>
    %85 = tpu.matmul %83, %84, %cst_60 {dimension_numbers = #tpu.dot_dimension_numbers<[1], [0], [0], [1], [0, 0, 1, 1], [], []>} : vector<8x80xf32>, vector<80x256xf32>, vector<8x256xf32> -> vector<8x256xf32>
    %cst_61 = arith.constant 0.000000e+00 : f32
    %86 = vector.broadcast %cst_61 : f32 to vector<8x256xf32>
    %87 = arith.maximumf %85, %86 : vector<8x256xf32>
    %c17_i32_62 = arith.constant 17 : i32
    %88 = tpu.dynamic_rotate %87 by %c17_i32_62 dim 1 : vector<8x256xf32>, i32 -> vector<8x256xf32>
    %89 = arith.mulf %88, %4 : vector<8x256xf32>
    %c0_63 = arith.constant 0 : index
    %c0_64 = arith.constant 0 : index
    %90 = vector.load %arg7[%c0_63, %c0_64] : memref<80x256xf32, #tpu.memory_space<vmem>>, vector<8x256xf32>
    tpu.vector_store %arg7[%c0_63, %c0_64], %89 {strides = array<i32>} : memref<80x256xf32, #tpu.memory_space<vmem>>, vector<8x256xf32>,
    %c16_i32_65 = arith.constant 16 : i32
    %91 = tpu.dynamic_rotate %87 by %c16_i32_65 dim 1 : vector<8x256xf32>, i32 -> vector<8x256xf32>
    %92 = arith.mulf %91, %7 : vector<8x256xf32>
    %c8_66 = arith.constant 8 : index
    %c0_67 = arith.constant 0 : index
    %93 = vector.load %arg7[%c8_66, %c0_67] : memref<80x256xf32, #tpu.memory_space<vmem>>, vector<8x256xf32>
    tpu.vector_store %arg7[%c8_66, %c0_67], %92 {strides = array<i32>} : memref<80x256xf32, #tpu.memory_space<vmem>>, vector<8x256xf32>,
    %c15_i32_68 = arith.constant 15 : i32
    %94 = tpu.dynamic_rotate %87 by %c15_i32_68 dim 1 : vector<8x256xf32>, i32 -> vector<8x256xf32>
    %95 = arith.mulf %94, %10 : vector<8x256xf32>
    %c16_69 = arith.constant 16 : index
    %c0_70 = arith.constant 0 : index
    %96 = vector.load %arg7[%c16_69, %c0_70] : memref<80x256xf32, #tpu.memory_space<vmem>>, vector<8x256xf32>
    tpu.vector_store %arg7[%c16_69, %c0_70], %95 {strides = array<i32>} : memref<80x256xf32, #tpu.memory_space<vmem>>, vector<8x256xf32>,
    %c1_i32_71 = arith.constant 1 : i32
    %97 = tpu.dynamic_rotate %87 by %c1_i32_71 dim 1 : vector<8x256xf32>, i32 -> vector<8x256xf32>
    %98 = arith.mulf %97, %13 : vector<8x256xf32>
    %c24_72 = arith.constant 24 : index
    %c0_73 = arith.constant 0 : index
    %99 = vector.load %arg7[%c24_72, %c0_73] : memref<80x256xf32, #tpu.memory_space<vmem>>, vector<8x256xf32>
    tpu.vector_store %arg7[%c24_72, %c0_73], %98 {strides = array<i32>} : memref<80x256xf32, #tpu.memory_space<vmem>>, vector<8x256xf32>,
    %c32_74 = arith.constant 32 : index
    %c0_75 = arith.constant 0 : index
    %100 = vector.load %arg7[%c32_74, %c0_75] : memref<80x256xf32, #tpu.memory_space<vmem>>, vector<8x256xf32>
    tpu.vector_store %arg7[%c32_74, %c0_75], %87 {strides = array<i32>} : memref<80x256xf32, #tpu.memory_space<vmem>>, vector<8x256xf32>,
    %c255_i32_76 = arith.constant 255 : i32
    %101 = tpu.dynamic_rotate %87 by %c255_i32_76 dim 1 : vector<8x256xf32>, i32 -> vector<8x256xf32>
    %102 = arith.mulf %101, %16 : vector<8x256xf32>
    %c40_77 = arith.constant 40 : index
    %c0_78 = arith.constant 0 : index
    %103 = vector.load %arg7[%c40_77, %c0_78] : memref<80x256xf32, #tpu.memory_space<vmem>>, vector<8x256xf32>
    tpu.vector_store %arg7[%c40_77, %c0_78], %102 {strides = array<i32>} : memref<80x256xf32, #tpu.memory_space<vmem>>, vector<8x256xf32>,
    %c241_i32_79 = arith.constant 241 : i32
    %104 = tpu.dynamic_rotate %87 by %c241_i32_79 dim 1 : vector<8x256xf32>, i32 -> vector<8x256xf32>
    %105 = arith.mulf %104, %19 : vector<8x256xf32>
    %c48_80 = arith.constant 48 : index
    %c0_81 = arith.constant 0 : index
    %106 = vector.load %arg7[%c48_80, %c0_81] : memref<80x256xf32, #tpu.memory_space<vmem>>, vector<8x256xf32>
    tpu.vector_store %arg7[%c48_80, %c0_81], %105 {strides = array<i32>} : memref<80x256xf32, #tpu.memory_space<vmem>>, vector<8x256xf32>,
    %c240_i32_82 = arith.constant 240 : i32
    %107 = tpu.dynamic_rotate %87 by %c240_i32_82 dim 1 : vector<8x256xf32>, i32 -> vector<8x256xf32>
    %108 = arith.mulf %107, %22 : vector<8x256xf32>
    %c56_83 = arith.constant 56 : index
    %c0_84 = arith.constant 0 : index
    %109 = vector.load %arg7[%c56_83, %c0_84] : memref<80x256xf32, #tpu.memory_space<vmem>>, vector<8x256xf32>
    tpu.vector_store %arg7[%c56_83, %c0_84], %108 {strides = array<i32>} : memref<80x256xf32, #tpu.memory_space<vmem>>, vector<8x256xf32>,
    %c239_i32_85 = arith.constant 239 : i32
    %110 = tpu.dynamic_rotate %87 by %c239_i32_85 dim 1 : vector<8x256xf32>, i32 -> vector<8x256xf32>
    %111 = arith.mulf %110, %25 : vector<8x256xf32>
    %c64_86 = arith.constant 64 : index
    %c0_87 = arith.constant 0 : index
    %112 = vector.load %arg7[%c64_86, %c0_87] : memref<80x256xf32, #tpu.memory_space<vmem>>, vector<8x256xf32>
    tpu.vector_store %arg7[%c64_86, %c0_87], %111 {strides = array<i32>} : memref<80x256xf32, #tpu.memory_space<vmem>>, vector<8x256xf32>,
    %c0_88 = arith.constant 0 : index
    %c0_89 = arith.constant 0 : index
    %113 = vector.load %arg5[%c0_88, %c0_89] : memref<8x80xf32, #tpu.memory_space<vmem>>, vector<8x80xf32>
    %c0_90 = arith.constant 0 : index
    %c0_91 = arith.constant 0 : index
    %114 = vector.load %arg7[%c0_90, %c0_91] : memref<80x256xf32, #tpu.memory_space<vmem>>, vector<80x256xf32>
    %cst_92 = arith.constant dense<0.000000e+00> : vector<8x256xf32>
    %115 = tpu.matmul %113, %114, %cst_92 {dimension_numbers = #tpu.dot_dimension_numbers<[1], [0], [0], [1], [0, 0, 1, 1], [], []>} : vector<8x80xf32>, vector<80x256xf32>, vector<8x256xf32> -> vector<8x256xf32>
    %c0_93 = arith.constant 0 : index
    %c0_94 = arith.constant 0 : index
    %c0_95 = arith.constant 0 : index
    %116 = vector.load %arg6[%c0_93, %c0_94, %c0_95] : memref<1x8x256xf32, #tpu.memory_space<vmem>>, vector<1x8x256xf32>
    %117 = vector.shape_cast %116 : vector<1x8x256xf32> to vector<8x256xf32>
    %118 = vector.shape_cast %115 : vector<8x256xf32> to vector<1x8x256xf32>
    tpu.vector_store %arg6[%c0_93, %c0_94, %c0_95], %118 {strides = array<i32>} : memref<1x8x256xf32, #tpu.memory_space<vmem>>, vector<1x8x256xf32>,
    return
  }
  func.func @transform_0(%arg0: i32) -> (i32, i32, i32) {
    %c0_i32 = arith.constant 0 : i32
    %c0_i32_0 = arith.constant 0 : i32
    %c0_i32_1 = arith.constant 0 : i32
    return %arg0, %c0_i32, %c0_i32_0 : i32, i32, i32
  }
  func.func @transform_1(%arg0: i32) -> (i32, i32) {
    %c0_i32 = arith.constant 0 : i32
    %c0_i32_0 = arith.constant 0 : i32
    %c0_i32_1 = arith.constant 0 : i32
    return %c0_i32, %c0_i32_0 : i32, i32
  }
  func.func @transform_2(%arg0: i32) -> (i32, i32) {
    %c0_i32 = arith.constant 0 : i32
    %c0_i32_0 = arith.constant 0 : i32
    %c0_i32_1 = arith.constant 0 : i32
    return %c0_i32, %c0_i32_0 : i32, i32
  }
  func.func @transform_3(%arg0: i32) -> (i32, i32) {
    %c0_i32 = arith.constant 0 : i32
    %c0_i32_0 = arith.constant 0 : i32
    %c0_i32_1 = arith.constant 0 : i32
    return %c0_i32, %c0_i32_0 : i32, i32
  }
  func.func @transform_4(%arg0: i32) -> (i32, i32) {
    %c0_i32 = arith.constant 0 : i32
    %c0_i32_0 = arith.constant 0 : i32
    %c0_i32_1 = arith.constant 0 : i32
    return %c0_i32, %c0_i32_0 : i32, i32
  }
  func.func @transform_5(%arg0: i32) -> (i32, i32, i32) {
    %c0_i32 = arith.constant 0 : i32
    %c0_i32_0 = arith.constant 0 : i32
    %c0_i32_1 = arith.constant 0 : i32
    return %arg0, %c0_i32, %c0_i32_0 : i32, i32, i32
  }
}

</mosaic_0001>

<llo_original>
// kernel: a_call__.1
$region0: #{a_call__.1}
  #allocation0 [shape = 'u32[]', space=smem, size = 0x4, offset = 0x4, fixed_abs, tag = 'smem constant byte address 0x4 - core index']
  #allocation1 [shape = 'u32[144,128]{1,0:T(1,128)}', space=vmem, size = 0x12000, scoped, tag = 'internal scratch']
  #allocation2 [shape = 'f32[80,256]{1,0:T(8,128)}', space=vmem, size = 0x14000, scoped, tag = 'scratch operand']
  %s0 = inlined_call_operand.vmem [shape: f32[2,8,256], index: 0, kind: input, shape index: {}]
  %s1 = inlined_call_operand.vmem [shape: f32[24,256], index: 1, kind: input, shape index: {}]
  %s2 = inlined_call_operand.vmem [shape: f32[8,80], index: 2, kind: input, shape index: {}]
  %s3 = inlined_call_operand.vmem [shape: f32[8,80], index: 3, kind: input, shape index: {}]
  %s4 = inlined_call_operand.vmem [shape: f32[8,80], index: 4, kind: input, shape index: {}]
  %s5 = inlined_call_operand.vmem [shape: f32[2,8,256], index: 5, kind: output, shape index: {}]
  %s6 = sld [smem:[#allocation0]]
  $region53: #{a_call__.1} parent=0
    _
  %s8 = ssub.s32 1, %s6
  %s9 = scalar_select 0, %s8, %s6
  loop: start=0, step=1, limit=4
  $region2: #{a_call__.1} parent=0 // loop_pre_header
    _
  $region3: #{a_call__.1} parent=0 // loop_header
    %s11 = sphi 0, %s15
    %p12 = scmp.ge.s32.totalorder %s11, 4
    %s21 = sphi 0, %s23
    %s24 = sphi 0, %s21
    %s25 = sphi 0, %s24
    %s41 = sphi 0, %s25
    %s45 = sphi 0, %s45
    %s47 = sphi 0, %s45
    %s48 = sphi 0, %s47
    %s62 = sphi 0, %s48
    %s66 = sphi 0, %s66
    %s68 = sphi 0, %s66
    %s69 = sphi 0, %s68
    %s83 = sphi 0, %s69
    %s87 = sphi 0, %s87
    %s89 = sphi 0, %s87
    %s90 = sphi 0, %s89
    %s104 = sphi 0, %s90
    %s108 = sphi 0, %s108
    %s110 = sphi 0, %s108
    %s111 = sphi 0, %s110
    %s125 = sphi 0, %s111
    %s131 = sphi 0, %s133
    %s134 = sphi 0, %s131
    %s135 = sphi 0, %s134
    %s151 = sphi 0, %s135
  $region4: #{a_call__.1} parent=0 // loop_header_branch
    %14 = sbr.rel (%p12) target = $region8
  $region5: #{a_call__.1} parent=0 // loop_body
    %s16 = ssub.s32 %s11, 1
    %s17 = ssub.s32 %s11, 2
    %s18 = sadd.s32 %s11, 1
    %s19 = ssub.s32 %s11, %s18
    %p20 = scmp.eq.s32.totalorder %s19, 0
    %s22 = sadd.s32 %s21, 1
    %s23 = scalar_select %p20, %s21, %s22
    %p26 = pneg %p20
    %p27 = scmp.eq.s32.totalorder %s11, 1
    %p28 = por %p26, %p27
    %p29 = scmp.ne.s32.totalorder %s21, %s24
    %p30 = scmp.eq.s32.totalorder %s11, 0
    %p31 = por %p29, %p30
    %p32 = scmp.ne.s32.totalorder %s21, %s24
    %p33 = scmp.eq.s32.totalorder %s16, 1
    %p34 = por %p32, %p33
    %p35 = scmp.ne.s32.totalorder %s24, %s25
    %p36 = scmp.eq.s32.totalorder %s16, 0
    %p37 = por %p35, %p36
    %p38 = scmp.ne.s32.totalorder %s24, %s25
    %p39 = scmp.eq.s32.totalorder %s17, 1
    %p40 = por %p38, %p39
    %p42 = scmp.ne.s32.totalorder %s25, %s41
    %p43 = scmp.eq.s32.totalorder %s17, 0
    %p44 = por %p42, %p43
    %s46 = sadd.s32 %s45, 1
    %p49 = scmp.eq.s32.totalorder %s11, 1
    %p50 = scmp.ne.s32.totalorder %s45, %s47
    %p51 = scmp.eq.s32.totalorder %s11, 0
    %p52 = por %p50, %p51
    %p53 = scmp.ne.s32.totalorder %s45, %s47
    %p54 = scmp.eq.s32.totalorder %s16, 1
    %p55 = por %p53, %p54
    %p56 = scmp.ne.s32.totalorder %s47, %s48
    %p57 = scmp.eq.s32.totalorder %s16, 0
    %p58 = por %p56, %p57
    %p59 = scmp.ne.s32.totalorder %s47, %s48
    %p60 = scmp.eq.s32.totalorder %s17, 1
    %p61 = por %p59, %p60
    %p63 = scmp.ne.s32.totalorder %s48, %s62
    %p64 = scmp.eq.s32.totalorder %s17, 0
    %p65 = por %p63, %p64
    %s67 = sadd.s32 %s66, 1
    %p70 = scmp.eq.s32.totalorder %s11, 1
    %p71 = scmp.ne.s32.totalorder %s66, %s68
    %p72 = scmp.eq.s32.totalorder %s11, 0
    %p73 = por %p71, %p72
    %p74 = scmp.ne.s32.totalorder %s66, %s68
    %p75 = scmp.eq.s32.totalorder %s16, 1
    %p76 = por %p74, %p75
    %p77 = scmp.ne.s32.totalorder %s68, %s69
    %p78 = scmp.eq.s32.totalorder %s16, 0
    %p79 = por %p77, %p78
    %p80 = scmp.ne.s32.totalorder %s68, %s69
    %p81 = scmp.eq.s32.totalorder %s17, 1
    %p82 = por %p80, %p81
    %p84 = scmp.ne.s32.totalorder %s69, %s83
    %p85 = scmp.eq.s32.totalorder %s17, 0
    %p86 = por %p84, %p85
    %s88 = sadd.s32 %s87, 1
    %p91 = scmp.eq.s32.totalorder %s11, 1
    %p92 = scmp.ne.s32.totalorder %s87, %s89
    %p93 = scmp.eq.s32.totalorder %s11, 0
    %p94 = por %p92, %p93
    %p95 = scmp.ne.s32.totalorder %s87, %s89
    %p96 = scmp.eq.s32.totalorder %s16, 1
    %p97 = por %p95, %p96
    %p98 = scmp.ne.s32.totalorder %s89, %s90
    %p99 = scmp.eq.s32.totalorder %s16, 0
    %p100 = por %p98, %p99
    %p101 = scmp.ne.s32.totalorder %s89, %s90
    %p102 = scmp.eq.s32.totalorder %s17, 1
    %p103 = por %p101, %p102
    %p105 = scmp.ne.s32.totalorder %s90, %s104
    %p106 = scmp.eq.s32.totalorder %s17, 0
    %p107 = por %p105, %p106
    %s109 = sadd.s32 %s108, 1
    %p112 = scmp.eq.s32.totalorder %s11, 1
    %p113 = scmp.ne.s32.totalorder %s108, %s110
    %p114 = scmp.eq.s32.totalorder %s11, 0
    %p115 = por %p113, %p114
    %p116 = scmp.ne.s32.totalorder %s108, %s110
    %p117 = scmp.eq.s32.totalorder %s16, 1
    %p118 = por %p116, %p117
    %p119 = scmp.ne.s32.totalorder %s110, %s111
    %p120 = scmp.eq.s32.totalorder %s16, 0
    %p121 = por %p119, %p120
    %p122 = scmp.ne.s32.totalorder %s110, %s111
    %p123 = scmp.eq.s32.totalorder %s17, 1
    %p124 = por %p122, %p123
    %p126 = scmp.ne.s32.totalorder %s111, %s125
    %p127 = scmp.eq.s32.totalorder %s17, 0
    %p128 = por %p126, %p127
    %s129 = ssub.s32 %s11, %s18
    %p130 = scmp.eq.s32.totalorder %s129, 0
    %s132 = sadd.s32 %s131, 1
    %s133 = scalar_select %p130, %s131, %s132
    %p136 = pneg %p130
    %p137 = scmp.eq.s32.totalorder %s11, 1
    %p138 = por %p136, %p137
    %p139 = scmp.ne.s32.totalorder %s131, %s134
    %p140 = scmp.eq.s32.totalorder %s11, 0
    %p141 = por %p139, %p140
    %p142 = scmp.ne.s32.totalorder %s131, %s134
    %p143 = scmp.eq.s32.totalorder %s16, 1
    %p144 = por %p142, %p143
    %p145 = scmp.ne.s32.totalorder %s134, %s135
    %p146 = scmp.eq.s32.totalorder %s16, 0
    %p147 = por %p145, %p146
    %p148 = scmp.ne.s32.totalorder %s134, %s135
    %p149 = scmp.eq.s32.totalorder %s17, 1
    %p150 = por %p148, %p149
    %p152 = scmp.ne.s32.totalorder %s135, %s151
    %p153 = scmp.eq.s32.totalorder %s17, 0
    %p154 = por %p152, %p153
    %p155 = scmp.le.s32.totalorder 1, %s11
    %p156 = scmp.lt.s32.totalorder %s11, 3
    %p157 = pnand %p155, %p156
    %p158 = pneg %p157
    // Predicated region
    $region9: #{a_call__.1} parent=5 // pred_check
      _
    $region10: #{a_call__.1} parent=5 // pred_check_branch
      %160 = sbr.rel (%p157) target = $region12
    $region11: #{a_call__.1} parent=5 // pred_region
      %s161 = ssub.s32 %s11, 1
      // Predicated region
      $region13: #{a_call__.1} parent=11 // pred_check
        %p162 = pneg %p58
      $region14: #{a_call__.1} parent=11 // pred_check_branch
        %164 = sbr.rel (%p162) target = $region16
      $region15: #{a_call__.1} parent=11 // pred_region
        _
      $region16: #{a_call__.1} parent=11 // pred_fallthru
        _
      // Predicated region
      $region17: #{a_call__.1} parent=11 // pred_check
        %p165 = pneg %p79
      $region18: #{a_call__.1} parent=11 // pred_check_branch
        %167 = sbr.rel (%p165) target = $region20
      $region19: #{a_call__.1} parent=11 // pred_region
        _
      $region20: #{a_call__.1} parent=11 // pred_fallthru
        _
      // Predicated region
      $region21: #{a_call__.1} parent=11 // pred_check
        %p168 = pneg %p100
      $region22: #{a_call__.1} parent=11 // pred_check_branch
        %170 = sbr.rel (%p168) target = $region24
      $region23: #{a_call__.1} parent=11 // pred_region
        _
      $region24: #{a_call__.1} parent=11 // pred_fallthru
        _
      // Predicated region
      $region25: #{a_call__.1} parent=11 // pred_check
        %p171 = pneg %p121
      $region26: #{a_call__.1} parent=11 // pred_check_branch
        %173 = sbr.rel (%p171) target = $region28
      $region27: #{a_call__.1} parent=11 // pred_region
        _
      $region28: #{a_call__.1} parent=11 // pred_fallthru
        _
    $region12: #{a_call__.1} parent=5 // pred_fallthru
      _
    %p174 = scmp.lt.s32.totalorder %s11, 2
    // Predicated region
    $region29: #{a_call__.1} parent=5 // pred_check
      %p175 = pneg %p174
    $region30: #{a_call__.1} parent=5 // pred_check_branch
      %177 = sbr.rel (%p175) target = $region32
    $region31: #{a_call__.1} parent=5 // pred_region
      // Predicated region
      $region33: #{a_call__.1} parent=31 // pred_check
        %p178 = pneg %p31
      $region34: #{a_call__.1} parent=31 // pred_check_branch
        %180 = sbr.rel (%p178) target = $region36
      $region35: #{a_call__.1} parent=31 // pred_region
        %p181 = scmp.lt.s32.totalorder %s11, 1
        %s182 = scalar_select %p181, %s11, 1
        %s183 = smul.addr %s182, 2
        %s184 = smul.addr %s183, 8
        %s185 = scalar_lea.vmem %s0, %s184
      $region36: #{a_call__.1} parent=31 // pred_fallthru
        _
    $region32: #{a_call__.1} parent=5 // pred_fallthru
      _
    %p186 = scmp.le.s32.totalorder 1, %s11
    %p187 = scmp.lt.s32.totalorder %s11, 3
    %p188 = pnand %p186, %p187
    %p189 = pneg %p188
    // Predicated region
    $region37: #{a_call__.1} parent=5 // pred_check
      _
    $region38: #{a_call__.1} parent=5 // pred_check_branch
      %191 = sbr.rel (%p188) target = $region40
    $region39: #{a_call__.1} parent=5 // pred_region
      %s192 = ssub.s32 %s11, 1
      %p193 = scmp.lt.s32.totalorder %s16, 1
      %s194 = scalar_select %p193, %s16, 1
      %s195 = smul.addr %s194, 2
      %s196 = smul.addr %s195, 8
      %s197 = scalar_lea.vmem %s0, %s196
      %p198 = pneg %p37
      %p199 = pneg %p34
      %p200 = pneg %p58
      %p201 = pneg %p55
      %p202 = pneg %p79
      %p203 = pneg %p76
      %p204 = pneg %p100
      %p205 = pneg %p97
      %p206 = pneg %p121
      %p207 = pneg %p118
      %p208 = pneg %p147
      %p209 = pneg %p144
      %p210 = scmp.lt.s32.totalorder %s16, 1
      %s211 = scalar_select %p210, %s16, 1
      %s212 = smul.addr %s211, 2
      %s213 = smul.addr %s212, 8
      %s214 = scalar_lea.vmem %s5, %s213
      %p215 = scmp.lt.s32.totalorder %s16, 1
      %s216 = scalar_select %p215, %s16, 1
      %s217 = smul.addr %s216, 2
      %s218 = smul.addr %s217, 8
      %s219 = scalar_lea.vmem %s0, %s218
      %p220 = scmp.lt.s32.totalorder %s16, 1
      %s221 = scalar_select %p220, %s16, 1
      %s222 = smul.addr %s221, 2
      %s223 = smul.addr %s222, 8
      %s224 = scalar_lea.vmem %s5, %s223
      %v225 = vld [vmem:[%s1] sm:$0xff]
      %v226 = vld [vmem:[%s1 + $0x8] sm:$0xff]
      %227 = vst [vmem:[#allocation2 + $0x90] sm:$0xff] %v225
      %228 = vst [vmem:[#allocation2 + $0x98] sm:$0xff] %v226
      %s229 = scalar_lea.vmem %s1, 16
      %v230 = vld [vmem:[%s229] ss:$8 sm:$0x3]
      %v232 = vlaneseq
      %v233 = vshrl.u32 %v232, 7
      %v234 = vsub.s32 0, %v233
      %v235 = vrot.slane %v230, %v234
      %v236 = vlaneseq
      %v237 = vshrl.u32 %v236, 7
      %v238 = vsub.s32 1, %v237
      %v239 = vrot.slane %v230, %v238
      %s242 = scalar_lea.vmem %s1, 17
      %v243 = vld [vmem:[%s242] ss:$8 sm:$0x3]
      %v245 = vlaneseq
      %v246 = vshrl.u32 %v245, 7
      %v247 = vsub.s32 0, %v246
      %v248 = vrot.slane %v243, %v247
      %v249 = vlaneseq
      %v250 = vshrl.u32 %v249, 7
      %v251 = vsub.s32 1, %v250
      %v252 = vrot.slane %v243, %v251
      %s255 = scalar_lea.vmem %s1, 18
      %v256 = vld [vmem:[%s255] ss:$8 sm:$0x3]
      %v258 = vlaneseq
      %v259 = vshrl.u32 %v258, 7
      %v260 = vsub.s32 0, %v259
      %v261 = vrot.slane %v256, %v260
      %v262 = vlaneseq
      %v263 = vshrl.u32 %v262, 7
      %v264 = vsub.s32 1, %v263
      %v265 = vrot.slane %v256, %v264
      %s268 = scalar_lea.vmem %s1, 19
      %v269 = vld [vmem:[%s268] ss:$8 sm:$0x3]
      %v271 = vlaneseq
      %v272 = vshrl.u32 %v271, 7
      %v273 = vsub.s32 0, %v272
      %v274 = vrot.slane %v269, %v273
      %v275 = vlaneseq
      %v276 = vshrl.u32 %v275, 7
      %v277 = vsub.s32 1, %v276
      %v278 = vrot.slane %v269, %v277
      %s281 = scalar_lea.vmem %s1, 21
      %v282 = vld [vmem:[%s281] ss:$8 sm:$0x3]
      %v284 = vlaneseq
      %v285 = vshrl.u32 %v284, 7
      %v286 = vsub.s32 0, %v285
      %v287 = vrot.slane %v282, %v286
      %v288 = vlaneseq
      %v289 = vshrl.u32 %v288, 7
      %v290 = vsub.s32 1, %v289
      %v291 = vrot.slane %v282, %v290
      %s294 = scalar_lea.vmem %s1, 22
      %v295 = vld [vmem:[%s294] ss:$8 sm:$0x3]
      %v297 = vlaneseq
      %v298 = vshrl.u32 %v297, 7
      %v299 = vsub.s32 0, %v298
      %v300 = vrot.slane %v295, %v299
      %v301 = vlaneseq
      %v302 = vshrl.u32 %v301, 7
      %v303 = vsub.s32 1, %v302
      %v304 = vrot.slane %v295, %v303
      %s307 = scalar_lea.vmem %s1, 23
      %v308 = vld [vmem:[%s307] ss:$8 sm:$0x3]
      %v310 = vlaneseq
      %v311 = vshrl.u32 %v310, 7
      %v312 = vsub.s32 0, %v311
      %v313 = vrot.slane %v308, %v312
      %v314 = vlaneseq
      %v315 = vshrl.u32 %v314, 7
      %v316 = vsub.s32 1, %v315
      %v317 = vrot.slane %v308, %v316
      %s320 = scalar_lea.vmem %s1, 32
      %v321 = vld [vmem:[%s320] ss:$8 sm:$0x3]
      %v323 = vlaneseq
      %v324 = vshrl.u32 %v323, 7
      %v325 = vsub.s32 0, %v324
      %v326 = vrot.slane %v321, %v325
      %v327 = vlaneseq
      %v328 = vshrl.u32 %v327, 7
      %v329 = vsub.s32 1, %v328
      %v330 = vrot.slane %v321, %v329
      %v333 = vld [vmem:[%s219] sm:$0xff]
      %v334 = vld [vmem:[%s219 + $0x8] sm:$0xff]
      %335 = vrot.lane.b32.xlu0 %v333, 17
      %v336 = vpop.permute.xlu0 %335
      %337 = vrot.lane.b32.xlu0 %v334, 17
      %v338 = vpop.permute.xlu0 %337
      %v339 = vlaneseq
      %v340 = vand.u32 %v339, 127
      %vm341 = vcmp.lt.s32.totalorder %v340, 17
      %v342 = vsel %vm341, %v336, %v338
      %v343 = vsel %vm341, %v338, %v336
      %v344 = vmul.f32 %v343, %v235
      %v345 = vmul.f32 %v342, %v239
      %346 = vst [vmem:[#allocation2] sm:$0xff] %v344
      %347 = vst [vmem:[#allocation2 + $0x8] sm:$0xff] %v345
      %348 = vrot.lane.b32.xlu0 %v333, 16
      %v349 = vpop.permute.xlu0 %348
      %350 = vrot.lane.b32.xlu0 %v334, 16
      %v351 = vpop.permute.xlu0 %350
      %vm352 = vcmp.lt.s32.totalorder %v340, 16
      %v353 = vsel %vm352, %v349, %v351
      %v354 = vsel %vm352, %v351, %v349
      %v355 = vmul.f32 %v354, %v248
      %v356 = vmul.f32 %v353, %v252
      %357 = vst [vmem:[#allocation2 + $0x10] sm:$0xff] %v355
      %358 = vst [vmem:[#allocation2 + $0x18] sm:$0xff] %v356
      %359 = vrot.lane.b32.xlu0 %v333, 15
      %v360 = vpop.permute.xlu0 %359
      %361 = vrot.lane.b32.xlu0 %v334, 15
      %v362 = vpop.permute.xlu0 %361
      %vm363 = vcmp.lt.s32.totalorder %v340, 15
      %v364 = vsel %vm363, %v360, %v362
      %v365 = vsel %vm363, %v362, %v360
      %v366 = vmul.f32 %v365, %v261
      %v367 = vmul.f32 %v364, %v265
      %368 = vst [vmem:[#allocation2 + $0x20] sm:$0xff] %v366
      %369 = vst [vmem:[#allocation2 + $0x28] sm:$0xff] %v367
      %370 = vrot.lane.b32.xlu0 %v333, 1
      %v371 = vpop.permute.xlu0 %370
      %372 = vrot.lane.b32.xlu0 %v334, 1
      %v373 = vpop.permute.xlu0 %372
      %vm374 = vcmp.lt.s32.totalorder %v340, 1
      %v375 = vsel %vm374, %v371, %v373
      %v376 = vsel %vm374, %v373, %v371
      %v377 = vmul.f32 %v376, %v274
      %v378 = vmul.f32 %v375, %v278
      %379 = vst [vmem:[#allocation2 + $0x30] sm:$0xff] %v377
      %380 = vst [vmem:[#allocation2 + $0x38] sm:$0xff] %v378
      %381 = vst [vmem:[#allocation2 + $0x40] sm:$0xff] %v333
      %382 = vst [vmem:[#allocation2 + $0x48] sm:$0xff] %v334
      %383 = vrot.lane.b32.xlu0 %v333, 127
      %v384 = vpop.permute.xlu0 %383
      %385 = vrot.lane.b32.xlu0 %v334, 127
      %v386 = vpop.permute.xlu0 %385
      %vm387 = vcmp.lt.s32.totalorder %v340, 127
      %v388 = vsel %vm387, %v384, %v386
      %v389 = vsel %vm387, %v386, %v384
      %v390 = vmul.f32 %v388, %v287
      %v391 = vmul.f32 %v389, %v291
      %392 = vst [vmem:[#allocation2 + $0x50] sm:$0xff] %v390
      %393 = vst [vmem:[#allocation2 + $0x58] sm:$0xff] %v391
      %394 = vrot.lane.b32.xlu0 %v333, 113
      %v395 = vpop.permute.xlu0 %394
      %396 = vrot.lane.b32.xlu0 %v334, 113
      %v397 = vpop.permute.xlu0 %396
      %vm398 = vcmp.lt.s32.totalorder %v340, 113
      %v399 = vsel %vm398, %v395, %v397
      %v400 = vsel %vm398, %v397, %v395
      %v401 = vmul.f32 %v399, %v300
      %v402 = vmul.f32 %v400, %v304
      %403 = vst [vmem:[#allocation2 + $0x60] sm:$0xff] %v401
      %404 = vst [vmem:[#allocation2 + $0x68] sm:$0xff] %v402
      %405 = vrot.lane.b32.xlu0 %v333, 112
      %v406 = vpop.permute.xlu0 %405
      %407 = vrot.lane.b32.xlu0 %v334, 112
      %v408 = vpop.permute.xlu0 %407
      %vm409 = vcmp.lt.s32.totalorder %v340, 112
      %v410 = vsel %vm409, %v406, %v408
      %v411 = vsel %vm409, %v408, %v406
      %v412 = vmul.f32 %v410, %v313
      %v413 = vmul.f32 %v411, %v317
      %414 = vst [vmem:[#allocation2 + $0x70] sm:$0xff] %v412
      %415 = vst [vmem:[#allocation2 + $0x78] sm:$0xff] %v413
      %416 = vrot.lane.b32.xlu0 %v333, 111
      %v417 = vpop.permute.xlu0 %416
      %418 = vrot.lane.b32.xlu0 %v334, 111
      %v419 = vpop.permute.xlu0 %418
      %vm420 = vcmp.lt.s32.totalorder %v340, 111
      %v421 = vsel %vm420, %v417, %v419
      %v422 = vsel %vm420, %v419, %v417
      %v423 = vmul.f32 %v421, %v326
      %v424 = vmul.f32 %v422, %v330
      %425 = vst [vmem:[#allocation2 + $0x80] sm:$0xff] %v423
      %426 = vst [vmem:[#allocation2 + $0x88] sm:$0xff] %v424
      %v427 = vld [vmem:[%s2] sm:$0xff]
      %v428 = vld [vmem:[#allocation2] sm:$0xff]
      %v429 = vld [vmem:[#allocation2 + $0x8] sm:$0xff]
      %v430 = vld [vmem:[#allocation2 + $0x10] sm:$0xff]
      %v431 = vld [vmem:[#allocation2 + $0x18] sm:$0xff]
      %v432 = vld [vmem:[#allocation2 + $0x20] sm:$0xff]
      %v433 = vld [vmem:[#allocation2 + $0x28] sm:$0xff]
      %v434 = vld [vmem:[#allocation2 + $0x30] sm:$0xff]
      %v435 = vld [vmem:[#allocation2 + $0x38] sm:$0xff]
      %v436 = vld [vmem:[#allocation2 + $0x40] sm:$0xff]
      %v437 = vld [vmem:[#allocation2 + $0x48] sm:$0xff]
      %v438 = vld [vmem:[#allocation2 + $0x50] sm:$0xff]
      %v439 = vld [vmem:[#allocation2 + $0x58] sm:$0xff]
      %v440 = vld [vmem:[#allocation2 + $0x60] sm:$0xff]
      %v441 = vld [vmem:[#allocation2 + $0x68] sm:$0xff]
      %v442 = vld [vmem:[#allocation2 + $0x70] sm:$0xff]
      %v443 = vld [vmem:[#allocation2 + $0x78] sm:$0xff]
      %v444 = vld [vmem:[#allocation2 + $0x80] sm:$0xff]
      %v445 = vld [vmem:[#allocation2 + $0x88] sm:$0xff]
      %v446 = vld [vmem:[#allocation2 + $0x90] sm:$0xff]
      %v447 = vld [vmem:[#allocation2 + $0x98] sm:$0xff]
      %vm448 = vcmask 654336
      %v450 = vsel %vm448, %v427, 0
      %452 = vmatprep.subr.mxu0 0.0
      %453 = vmatpush1.msra.mxu0 0.0
      %454 = vmatprep.subr.mxu0 0.0
      %455 = vmatpush1.msra.mxu0 0.0
      %456 = vmatprep.subr.mxu0 0.0
      %457 = vmatpush1.msra.mxu0 0.0
      %458 = vmatprep.subr.mxu0 0.0
      %459 = vmatpush1.msra.mxu0 0.0
      %460 = vmatprep.subr.mxu0 0.0
      %461 = vmatpush1.msra.mxu0 0.0
      %462 = vmatprep.subr.mxu0 0.0
      %463 = vmatpush1.msra.mxu0 0.0
      %464 = vmatprep.subr.mxu0 %v447
      %465 = vmatpush1.msra.mxu0 %v446
      %466 = vmatprep.subr.mxu0 %v445
      %467 = vmatpush1.msra.mxu0 %v444
      %468 = vmatprep.subr.mxu0 %v443
      %469 = vmatpush1.msra.mxu0 %v442
      %470 = vmatprep.subr.mxu0 %v441
      %471 = vmatpush1.msra.mxu0 %v440
      %472 = vmatprep.subr.mxu0 %v439
      %473 = vmatpush1.msra.mxu0 %v438
      %474 = vmatprep.subr.mxu0 %v437
      %475 = vmatpush1.msra.mxu0 %v436
      %476 = vmatprep.subr.mxu0 %v435
      %477 = vmatpush1.msra.mxu0 %v434
      %478 = vmatprep.subr.mxu0 %v433
      %479 = vmatpush1.msra.mxu0 %v432
      %480 = vmatprep.subr.mxu0 %v431
      %481 = vmatpush1.msra.mxu0 %v430
      %482 = vmatprep.subr.mxu0 %v429
      %483 = vmatpush1.msra.mxu0 %v428
      %484 = vmatprep.subr.mxu0 0.0
      %485 = vmatpush2.msra.mxu0 0.0
      %486 = vmatprep.subr.mxu0 0.0
      %487 = vmatpush2.msra.mxu0 0.0
      %488 = vmatprep.subr.mxu0 0.0
      %489 = vmatpush2.msra.mxu0 0.0
      %490 = vmatprep.subr.mxu0 0.0
      %491 = vmatpush2.msra.mxu0 0.0
      %492 = vmatprep.subr.mxu0 0.0
      %493 = vmatpush2.msra.mxu0 0.0
      %494 = vmatprep.subr.mxu0 0.0
      %495 = vmatpush2.msra.mxu0 0.0
      %496 = vmatprep.subr.mxu0 0.0
      %497 = vmatpush2.msra.mxu0 0.0
      %498 = vmatprep.subr.mxu0 0.0
      %499 = vmatpush2.msra.mxu0 0.0
      %500 = vmatprep.subr.mxu0 0.0
      %501 = vmatpush2.msra.mxu0 0.0
      %502 = vmatprep.subr.mxu0 0.0
      %503 = vmatpush2.msra.mxu0 0.0
      %504 = vmatprep.subr.mxu0 0.0
      %505 = vmatpush2.msra.mxu0 0.0
      %506 = vmatprep.subr.mxu0 0.0
      %507 = vmatpush2.msra.mxu0 0.0
      %508 = vmatprep.subr.mxu0 0.0
      %509 = vmatpush2.msra.mxu0 0.0
      %510 = vmatprep.subr.mxu0 0.0
      %511 = vmatpush2.msra.mxu0 0.0
      %512 = vmatprep.subr.mxu0 0.0
      %513 = vmatpush2.msra.mxu0 0.0
      %514 = vmatprep.subr.mxu0 0.0
      %515 = vmatpush2.msra.mxu0 0.0
      %516 = vmatprep.mubr.f32.mxu0 0.0
      %517 = vmatmul.mubr.f32.gmra.mxu0 %v450
      %v518 = vpop.f32.mrf.mxu0
      %v519 = vadd.f32 0.0, %v518
      %v520 = vpop.f32.mrf.mxu0
      %v521 = vadd.f32 0.0, %v520
      %522 = vdwg.mxu0
      %v523 = vmax.f32 %v519, 0.0
      %v524 = vmax.f32 %v521, 0.0
      %525 = vrot.lane.b32.xlu0 %v523, 17
      %v526 = vpop.permute.xlu0 %525
      %527 = vrot.lane.b32.xlu0 %v524, 17
      %v528 = vpop.permute.xlu0 %527
      %v529 = vsel %vm341, %v526, %v528
      %v530 = vsel %vm341, %v528, %v526
      %v531 = vmul.f32 %v530, %v235
      %v532 = vmul.f32 %v529, %v239
      %533 = vst [vmem:[#allocation2] sm:$0xff] %v531
      %534 = vst [vmem:[#allocation2 + $0x8] sm:$0xff] %v532
      %535 = vrot.lane.b32.xlu0 %v523, 16
      %v536 = vpop.permute.xlu0 %535
      %537 = vrot.lane.b32.xlu0 %v524, 16
      %v538 = vpop.permute.xlu0 %537
      %v539 = vsel %vm352, %v536, %v538
      %v540 = vsel %vm352, %v538, %v536
      %v541 = vmul.f32 %v540, %v248
      %v542 = vmul.f32 %v539, %v252
      %543 = vst [vmem:[#allocation2 + $0x10] sm:$0xff] %v541
      %544 = vst [vmem:[#allocation2 + $0x18] sm:$0xff] %v542
      %545 = vrot.lane.b32.xlu0 %v523, 15
      %v546 = vpop.permute.xlu0 %545
      %547 = vrot.lane.b32.xlu0 %v524, 15
      %v548 = vpop.permute.xlu0 %547
      %v549 = vsel %vm363, %v546, %v548
      %v550 = vsel %vm363, %v548, %v546
      %v551 = vmul.f32 %v550, %v261
      %v552 = vmul.f32 %v549, %v265
      %553 = vst [vmem:[#allocation2 + $0x20] sm:$0xff] %v551
      %554 = vst [vmem:[#allocation2 + $0x28] sm:$0xff] %v552
      %555 = vrot.lane.b32.xlu0 %v523, 1
      %v556 = vpop.permute.xlu0 %555
      %557 = vrot.lane.b32.xlu0 %v524, 1
      %v558 = vpop.permute.xlu0 %557
      %v559 = vsel %vm374, %v556, %v558
      %v560 = vsel %vm374, %v558, %v556
      %v561 = vmul.f32 %v560, %v274
      %v562 = vmul.f32 %v559, %v278
      %563 = vst [vmem:[#allocation2 + $0x30] sm:$0xff] %v561
      %564 = vst [vmem:[#allocation2 + $0x38] sm:$0xff] %v562
      %565 = vst [vmem:[#allocation2 + $0x40] sm:$0xff] %v523
      %566 = vst [vmem:[#allocation2 + $0x48] sm:$0xff] %v524
      %567 = vrot.lane.b32.xlu0 %v523, 127
      %v568 = vpop.permute.xlu0 %567
      %569 = vrot.lane.b32.xlu0 %v524, 127
      %v570 = vpop.permute.xlu0 %569
      %v571 = vsel %vm387, %v568, %v570
      %v572 = vsel %vm387, %v570, %v568
      %v573 = vmul.f32 %v571, %v287
      %v574 = vmul.f32 %v572, %v291
      %575 = vst [vmem:[#allocation2 + $0x50] sm:$0xff] %v573
      %576 = vst [vmem:[#allocation2 + $0x58] sm:$0xff] %v574
      %577 = vrot.lane.b32.xlu0 %v523, 113
      %v578 = vpop.permute.xlu0 %577
      %579 = vrot.lane.b32.xlu0 %v524, 113
      %v580 = vpop.permute.xlu0 %579
      %v581 = vsel %vm398, %v578, %v580
      %v582 = vsel %vm398, %v580, %v578
      %v583 = vmul.f32 %v581, %v300
      %v584 = vmul.f32 %v582, %v304
      %585 = vst [vmem:[#allocation2 + $0x60] sm:$0xff] %v583
      %586 = vst [vmem:[#allocation2 + $0x68] sm:$0xff] %v584
      %587 = vrot.lane.b32.xlu0 %v523, 112
      %v588 = vpop.permute.xlu0 %587
      %589 = vrot.lane.b32.xlu0 %v524, 112
      %v590 = vpop.permute.xlu0 %589
      %v591 = vsel %vm409, %v588, %v590
      %v592 = vsel %vm409, %v590, %v588
      %v593 = vmul.f32 %v591, %v313
      %v594 = vmul.f32 %v592, %v317
      %595 = vst [vmem:[#allocation2 + $0x70] sm:$0xff] %v593
      %596 = vst [vmem:[#allocation2 + $0x78] sm:$0xff] %v594
      %597 = vrot.lane.b32.xlu0 %v523, 111
      %v598 = vpop.permute.xlu0 %597
      %599 = vrot.lane.b32.xlu0 %v524, 111
      %v600 = vpop.permute.xlu0 %599
      %v601 = vsel %vm420, %v598, %v600
      %v602 = vsel %vm420, %v600, %v598
      %v603 = vmul.f32 %v601, %v326
      %v604 = vmul.f32 %v602, %v330
      %605 = vst [vmem:[#allocation2 + $0x80] sm:$0xff] %v603
      %606 = vst [vmem:[#allocation2 + $0x88] sm:$0xff] %v604
      %v607 = vld [vmem:[%s3] sm:$0xff]
      %v608 = vld [vmem:[#allocation2] sm:$0xff]
      %v609 = vld [vmem:[#allocation2 + $0x8] sm:$0xff]
      %v610 = vld [vmem:[#allocation2 + $0x10] sm:$0xff]
      %v611 = vld [vmem:[#allocation2 + $0x18] sm:$0xff]
      %v612 = vld [vmem:[#allocation2 + $0x20] sm:$0xff]
      %v613 = vld [vmem:[#allocation2 + $0x28] sm:$0xff]
      %v614 = vld [vmem:[#allocation2 + $0x30] sm:$0xff]
      %v615 = vld [vmem:[#allocation2 + $0x38] sm:$0xff]
      %v616 = vld [vmem:[#allocation2 + $0x40] sm:$0xff]
      %v617 = vld [vmem:[#allocation2 + $0x48] sm:$0xff]
      %v618 = vld [vmem:[#allocation2 + $0x50] sm:$0xff]
      %v619 = vld [vmem:[#allocation2 + $0x58] sm:$0xff]
      %v620 = vld [vmem:[#allocation2 + $0x60] sm:$0xff]
      %v621 = vld [vmem:[#allocation2 + $0x68] sm:$0xff]
      %v622 = vld [vmem:[#allocation2 + $0x70] sm:$0xff]
      %v623 = vld [vmem:[#allocation2 + $0x78] sm:$0xff]
      %v624 = vld [vmem:[#allocation2 + $0x80] sm:$0xff]
      %v625 = vld [vmem:[#allocation2 + $0x88] sm:$0xff]
      %v626 = vld [vmem:[#allocation2 + $0x90] sm:$0xff]
      %v627 = vld [vmem:[#allocation2 + $0x98] sm:$0xff]
      %v629 = vsel %vm448, %v607, 0
      %631 = vmatprep.subr.mxu0 0.0
      %632 = vmatpush1.msra.mxu0 0.0
      %633 = vmatprep.subr.mxu0 0.0
      %634 = vmatpush1.msra.mxu0 0.0
      %635 = vmatprep.subr.mxu0 0.0
      %636 = vmatpush1.msra.mxu0 0.0
      %637 = vmatprep.subr.mxu0 0.0
      %638 = vmatpush1.msra.mxu0 0.0
      %639 = vmatprep.subr.mxu0 0.0
      %640 = vmatpush1.msra.mxu0 0.0
      %641 = vmatprep.subr.mxu0 0.0
      %642 = vmatpush1.msra.mxu0 0.0
      %643 = vmatprep.subr.mxu0 %v627
      %644 = vmatpush1.msra.mxu0 %v626
      %645 = vmatprep.subr.mxu0 %v625
      %646 = vmatpush1.msra.mxu0 %v624
      %647 = vmatprep.subr.mxu0 %v623
      %648 = vmatpush1.msra.mxu0 %v622
      %649 = vmatprep.subr.mxu0 %v621
      %650 = vmatpush1.msra.mxu0 %v620
      %651 = vmatprep.subr.mxu0 %v619
      %652 = vmatpush1.msra.mxu0 %v618
      %653 = vmatprep.subr.mxu0 %v617
      %654 = vmatpush1.msra.mxu0 %v616
      %655 = vmatprep.subr.mxu0 %v615
      %656 = vmatpush1.msra.mxu0 %v614
      %657 = vmatprep.subr.mxu0 %v613
      %658 = vmatpush1.msra.mxu0 %v612
      %659 = vmatprep.subr.mxu0 %v611
      %660 = vmatpush1.msra.mxu0 %v610
      %661 = vmatprep.subr.mxu0 %v609
      %662 = vmatpush1.msra.mxu0 %v608
      %663 = vmatprep.subr.mxu0 0.0
      %664 = vmatpush2.msra.mxu0 0.0
      %665 = vmatprep.subr.mxu0 0.0
      %666 = vmatpush2.msra.mxu0 0.0
      %667 = vmatprep.subr.mxu0 0.0
      %668 = vmatpush2.msra.mxu0 0.0
      %669 = vmatprep.subr.mxu0 0.0
      %670 = vmatpush2.msra.mxu0 0.0
      %671 = vmatprep.subr.mxu0 0.0
      %672 = vmatpush2.msra.mxu0 0.0
      %673 = vmatprep.subr.mxu0 0.0
      %674 = vmatpush2.msra.mxu0 0.0
      %675 = vmatprep.subr.mxu0 0.0
      %676 = vmatpush2.msra.mxu0 0.0
      %677 = vmatprep.subr.mxu0 0.0
      %678 = vmatpush2.msra.mxu0 0.0
      %679 = vmatprep.subr.mxu0 0.0
      %680 = vmatpush2.msra.mxu0 0.0
      %681 = vmatprep.subr.mxu0 0.0
      %682 = vmatpush2.msra.mxu0 0.0
      %683 = vmatprep.subr.mxu0 0.0
      %684 = vmatpush2.msra.mxu0 0.0
      %685 = vmatprep.subr.mxu0 0.0
      %686 = vmatpush2.msra.mxu0 0.0
      %687 = vmatprep.subr.mxu0 0.0
      %688 = vmatpush2.msra.mxu0 0.0
      %689 = vmatprep.subr.mxu0 0.0
      %690 = vmatpush2.msra.mxu0 0.0
      %691 = vmatprep.subr.mxu0 0.0
      %692 = vmatpush2.msra.mxu0 0.0
      %693 = vmatprep.subr.mxu0 0.0
      %694 = vmatpush2.msra.mxu0 0.0
      %695 = vmatprep.mubr.f32.mxu0 0.0
      %696 = vmatmul.mubr.f32.gmra.mxu0 %v629
      %v697 = vpop.f32.mrf.mxu0
      %v698 = vadd.f32 0.0, %v697
      %v699 = vpop.f32.mrf.mxu0
      %v700 = vadd.f32 0.0, %v699
      %701 = vdwg.mxu0
      %v702 = vmax.f32 %v698, 0.0
      %v703 = vmax.f32 %v700, 0.0
      %704 = vrot.lane.b32.xlu0 %v702, 17
      %v705 = vpop.permute.xlu0 %704
      %706 = vrot.lane.b32.xlu0 %v703, 17
      %v707 = vpop.permute.xlu0 %706
      %v708 = vsel %vm341, %v705, %v707
      %v709 = vsel %vm341, %v707, %v705
      %v710 = vmul.f32 %v709, %v235
      %v711 = vmul.f32 %v708, %v239
      %712 = vst [vmem:[#allocation2] sm:$0xff] %v710
      %713 = vst [vmem:[#allocation2 + $0x8] sm:$0xff] %v711
      %714 = vrot.lane.b32.xlu0 %v702, 16
      %v715 = vpop.permute.xlu0 %714
      %716 = vrot.lane.b32.xlu0 %v703, 16
      %v717 = vpop.permute.xlu0 %716
      %v718 = vsel %vm352, %v715, %v717
      %v719 = vsel %vm352, %v717, %v715
      %v720 = vmul.f32 %v719, %v248
      %v721 = vmul.f32 %v718, %v252
      %722 = vst [vmem:[#allocation2 + $0x10] sm:$0xff] %v720
      %723 = vst [vmem:[#allocation2 + $0x18] sm:$0xff] %v721
      %724 = vrot.lane.b32.xlu0 %v702, 15
      %v725 = vpop.permute.xlu0 %724
      %726 = vrot.lane.b32.xlu0 %v703, 15
      %v727 = vpop.permute.xlu0 %726
      %v728 = vsel %vm363, %v725, %v727
      %v729 = vsel %vm363, %v727, %v725
      %v730 = vmul.f32 %v729, %v261
      %v731 = vmul.f32 %v728, %v265
      %732 = vst [vmem:[#allocation2 + $0x20] sm:$0xff] %v730
      %733 = vst [vmem:[#allocation2 + $0x28] sm:$0xff] %v731
      %734 = vrot.lane.b32.xlu0 %v702, 1
      %v735 = vpop.permute.xlu0 %734
      %736 = vrot.lane.b32.xlu0 %v703, 1
      %v737 = vpop.permute.xlu0 %736
      %v738 = vsel %vm374, %v735, %v737
      %v739 = vsel %vm374, %v737, %v735
      %v740 = vmul.f32 %v739, %v274
      %v741 = vmul.f32 %v738, %v278
      %742 = vst [vmem:[#allocation2 + $0x30] sm:$0xff] %v740
      %743 = vst [vmem:[#allocation2 + $0x38] sm:$0xff] %v741
      %744 = vst [vmem:[#allocation2 + $0x40] sm:$0xff] %v702
      %745 = vst [vmem:[#allocation2 + $0x48] sm:$0xff] %v703
      %746 = vrot.lane.b32.xlu0 %v702, 127
      %v747 = vpop.permute.xlu0 %746
      %748 = vrot.lane.b32.xlu0 %v703, 127
      %v749 = vpop.permute.xlu0 %748
      %v750 = vsel %vm387, %v747, %v749
      %v751 = vsel %vm387, %v749, %v747
      %v752 = vmul.f32 %v750, %v287
      %v753 = vmul.f32 %v751, %v291
      %754 = vst [vmem:[#allocation2 + $0x50] sm:$0xff] %v752
      %755 = vst [vmem:[#allocation2 + $0x58] sm:$0xff] %v753
      %756 = vrot.lane.b32.xlu0 %v702, 113
      %v757 = vpop.permute.xlu0 %756
      %758 = vrot.lane.b32.xlu0 %v703, 113
      %v759 = vpop.permute.xlu0 %758
      %v760 = vsel %vm398, %v757, %v759
      %v761 = vsel %vm398, %v759, %v757
      %v762 = vmul.f32 %v760, %v300
      %v763 = vmul.f32 %v761, %v304
      %764 = vst [vmem:[#allocation2 + $0x60] sm:$0xff] %v762
      %765 = vst [vmem:[#allocation2 + $0x68] sm:$0xff] %v763
      %766 = vrot.lane.b32.xlu0 %v702, 112
      %v767 = vpop.permute.xlu0 %766
      %768 = vrot.lane.b32.xlu0 %v703, 112
      %v769 = vpop.permute.xlu0 %768
      %v770 = vsel %vm409, %v767, %v769
      %v771 = vsel %vm409, %v769, %v767
      %v772 = vmul.f32 %v770, %v313
      %v773 = vmul.f32 %v771, %v317
      %774 = vst [vmem:[#allocation2 + $0x70] sm:$0xff] %v772
      %775 = vst [vmem:[#allocation2 + $0x78] sm:$0xff] %v773
      %776 = vrot.lane.b32.xlu0 %v702, 111
      %v777 = vpop.permute.xlu0 %776
      %778 = vrot.lane.b32.xlu0 %v703, 111
      %v779 = vpop.permute.xlu0 %778
      %v780 = vsel %vm420, %v777, %v779
      %v781 = vsel %vm420, %v779, %v777
      %v782 = vmul.f32 %v780, %v326
      %v783 = vmul.f32 %v781, %v330
      %784 = vst [vmem:[#allocation2 + $0x80] sm:$0xff] %v782
      %785 = vst [vmem:[#allocation2 + $0x88] sm:$0xff] %v783
      %v786 = vld [vmem:[%s4] sm:$0xff]
      %v787 = vld [vmem:[#allocation2] sm:$0xff]
      %v788 = vld [vmem:[#allocation2 + $0x8] sm:$0xff]
      %v789 = vld [vmem:[#allocation2 + $0x10] sm:$0xff]
      %v790 = vld [vmem:[#allocation2 + $0x18] sm:$0xff]
      %v791 = vld [vmem:[#allocation2 + $0x20] sm:$0xff]
      %v792 = vld [vmem:[#allocation2 + $0x28] sm:$0xff]
      %v793 = vld [vmem:[#allocation2 + $0x30] sm:$0xff]
      %v794 = vld [vmem:[#allocation2 + $0x38] sm:$0xff]
      %v795 = vld [vmem:[#allocation2 + $0x40] sm:$0xff]
      %v796 = vld [vmem:[#allocation2 + $0x48] sm:$0xff]
      %v797 = vld [vmem:[#allocation2 + $0x50] sm:$0xff]
      %v798 = vld [vmem:[#allocation2 + $0x58] sm:$0xff]
      %v799 = vld [vmem:[#allocation2 + $0x60] sm:$0xff]
      %v800 = vld [vmem:[#allocation2 + $0x68] sm:$0xff]
      %v801 = vld [vmem:[#allocation2 + $0x70] sm:$0xff]
      %v802 = vld [vmem:[#allocation2 + $0x78] sm:$0xff]
      %v803 = vld [vmem:[#allocation2 + $0x80] sm:$0xff]
      %v804 = vld [vmem:[#allocation2 + $0x88] sm:$0xff]
      %v805 = vld [vmem:[#allocation2 + $0x90] sm:$0xff]
      %v806 = vld [vmem:[#allocation2 + $0x98] sm:$0xff]
      %v808 = vsel %vm448, %v786, 0
      %810 = vmatprep.subr.mxu0 0.0
      %811 = vmatpush1.msra.mxu0 0.0
      %812 = vmatprep.subr.mxu0 0.0
      %813 = vmatpush1.msra.mxu0 0.0
      %814 = vmatprep.subr.mxu0 0.0
      %815 = vmatpush1.msra.mxu0 0.0
      %816 = vmatprep.subr.mxu0 0.0
      %817 = vmatpush1.msra.mxu0 0.0
      %818 = vmatprep.subr.mxu0 0.0
      %819 = vmatpush1.msra.mxu0 0.0
      %820 = vmatprep.subr.mxu0 0.0
      %821 = vmatpush1.msra.mxu0 0.0
      %822 = vmatprep.subr.mxu0 %v806
      %823 = vmatpush1.msra.mxu0 %v805
      %824 = vmatprep.subr.mxu0 %v804
      %825 = vmatpush1.msra.mxu0 %v803
      %826 = vmatprep.subr.mxu0 %v802
      %827 = vmatpush1.msra.mxu0 %v801
      %828 = vmatprep.subr.mxu0 %v800
      %829 = vmatpush1.msra.mxu0 %v799
      %830 = vmatprep.subr.mxu0 %v798
      %831 = vmatpush1.msra.mxu0 %v797
      %832 = vmatprep.subr.mxu0 %v796
      %833 = vmatpush1.msra.mxu0 %v795
      %834 = vmatprep.subr.mxu0 %v794
      %835 = vmatpush1.msra.mxu0 %v793
      %836 = vmatprep.subr.mxu0 %v792
      %837 = vmatpush1.msra.mxu0 %v791
      %838 = vmatprep.subr.mxu0 %v790
      %839 = vmatpush1.msra.mxu0 %v789
      %840 = vmatprep.subr.mxu0 %v788
      %841 = vmatpush1.msra.mxu0 %v787
      %842 = vmatprep.subr.mxu0 0.0
      %843 = vmatpush2.msra.mxu0 0.0
      %844 = vmatprep.subr.mxu0 0.0
      %845 = vmatpush2.msra.mxu0 0.0
      %846 = vmatprep.subr.mxu0 0.0
      %847 = vmatpush2.msra.mxu0 0.0
      %848 = vmatprep.subr.mxu0 0.0
      %849 = vmatpush2.msra.mxu0 0.0
      %850 = vmatprep.subr.mxu0 0.0
      %851 = vmatpush2.msra.mxu0 0.0
      %852 = vmatprep.subr.mxu0 0.0
      %853 = vmatpush2.msra.mxu0 0.0
      %854 = vmatprep.subr.mxu0 0.0
      %855 = vmatpush2.msra.mxu0 0.0
      %856 = vmatprep.subr.mxu0 0.0
      %857 = vmatpush2.msra.mxu0 0.0
      %858 = vmatprep.subr.mxu0 0.0
      %859 = vmatpush2.msra.mxu0 0.0
      %860 = vmatprep.subr.mxu0 0.0
      %861 = vmatpush2.msra.mxu0 0.0
      %862 = vmatprep.subr.mxu0 0.0
      %863 = vmatpush2.msra.mxu0 0.0
      %864 = vmatprep.subr.mxu0 0.0
      %865 = vmatpush2.msra.mxu0 0.0
      %866 = vmatprep.subr.mxu0 0.0
      %867 = vmatpush2.msra.mxu0 0.0
      %868 = vmatprep.subr.mxu0 0.0
      %869 = vmatpush2.msra.mxu0 0.0
      %870 = vmatprep.subr.mxu0 0.0
      %871 = vmatpush2.msra.mxu0 0.0
      %872 = vmatprep.subr.mxu0 0.0
      %873 = vmatpush2.msra.mxu0 0.0
      %874 = vmatprep.mubr.f32.mxu0 0.0
      %875 = vmatmul.mubr.f32.gmra.mxu0 %v808
      %v876 = vpop.f32.mrf.mxu0
      %v877 = vadd.f32 0.0, %v876
      %v878 = vpop.f32.mrf.mxu0
      %v879 = vadd.f32 0.0, %v878
      %880 = vdwg.mxu0
      %881 = vst [vmem:[%s224] sm:$0xff] %v877
      %882 = vst [vmem:[%s224 + $0x8] sm:$0xff] %v879
      %p883 = scmp.lt.s32.totalorder %s16, 1
      %s884 = scalar_select %p883, %s16, 1
      %s885 = smul.addr %s884, 2
      %s886 = smul.addr %s885, 8
      %s887 = scalar_lea.vmem %s5, %s886
      // Predicated region
      $region41: #{a_call__.1} parent=39 // pred_check
        %p888 = pneg %p144
      $region42: #{a_call__.1} parent=39 // pred_check_branch
        %890 = sbr.rel (%p888) target = $region44
      $region43: #{a_call__.1} parent=39 // pred_region
        _
      $region44: #{a_call__.1} parent=39 // pred_fallthru
        _
    $region40: #{a_call__.1} parent=5 // pred_fallthru
      _
    %p891 = scmp.le.s32.totalorder 2, %s11
    // Predicated region
    $region45: #{a_call__.1} parent=5 // pred_check
      %p892 = pneg %p891
    $region46: #{a_call__.1} parent=5 // pred_check_branch
      %894 = sbr.rel (%p892) target = $region48
    $region47: #{a_call__.1} parent=5 // pred_region
      %s895 = ssub.s32 %s11, 2
      // Predicated region
      $region49: #{a_call__.1} parent=47 // pred_check
        %p896 = pneg %p150
      $region50: #{a_call__.1} parent=47 // pred_check_branch
        %898 = sbr.rel (%p896) target = $region52
      $region51: #{a_call__.1} parent=47 // pred_region
        %p899 = scmp.lt.s32.totalorder %s17, 1
        %s900 = scalar_select %p899, %s17, 1
        %s901 = smul.addr %s900, 2
        %s902 = smul.addr %s901, 8
        %s903 = scalar_lea.vmem %s5, %s902
      $region52: #{a_call__.1} parent=47 // pred_fallthru
        _
    $region48: #{a_call__.1} parent=5 // pred_fallthru
      _
  $region6: #{a_call__.1} parent=0 // loop_footer
    %s15 = sadd.s32 1, %s11
  $region7: #{a_call__.1} parent=0 // loop_footer_branch
    %10 = sbr.rel target = $region3
  $region8: #{a_call__.1} parent=0 // loop_exit
    _

</llo_original>
